<compile_context>
chip_gen: v5e
topology: v5e:2x2
jax: 0.10.0
libtpu: 0.0.40
codegen_flags: <defaults>
</compile_context>

<pallas_src>
import functools

import jax
import jax.numpy as jnp
from jax.experimental import pallas as pl
from jax.experimental.pallas import tpu as pltpu


def _gated_conv_kernel(x_ref, w_ref, b_ref, o_ref, acc_ref, *,
                       init_tap, rest_taps, zero_cols, w_cols, pad,
                       compute_dtype):
    """One (batch element, out-channel block) per grid step.

    x_ref  : (1, C, S)        x in native channel-major layout, S = H*W
    w_ref  : (KH, 2T, C)      weight-normalized taps for this channel block
                              (rows 0..T-1 -> 'out', rows T..2T-1 -> 'gate')
    b_ref  : (2T, 1) f32      bias for this channel block
    o_ref  : (1, T, S_out)    gated output block, S_out = H_out*W
    acc_ref: (2T, S_out) f32  accumulator scratch
    """

    def tap_contrib(t, h_lo, h_hi):
        rows = h_hi - h_lo
        a_in = (h_lo + t - pad) * w_cols
        xs = x_ref[0, :, a_in:a_in + rows * w_cols].astype(compute_dtype)
        # (2T, C) @ (C, rows*W) -> (2T, rows*W), f32 accumulation on the MXU.
        return jnp.dot(w_ref[t], xs, preferred_element_type=jnp.float32)

    # Initialize with the maximal-coverage tap ('=', no zero-init pass), zero
    # only rows it does not cover (statically empty for odd widths / nopad),
    # then '+=' the remaining taps.  KH is small & static -> unrolled.
    if init_tap is not None:
        t, h_lo, h_hi = init_tap
        acc_ref[:, h_lo * w_cols:h_hi * w_cols] = tap_contrib(t, h_lo, h_hi)
    for c_lo, c_hi in zero_cols:
        acc_ref[:, c_lo:c_hi] = jnp.zeros(
            (acc_ref.shape[0], c_hi - c_lo), jnp.float32)
    for t, h_lo, h_hi in rest_taps:
        acc_ref[:, h_lo * w_cols:h_hi * w_cols] += tap_contrib(t, h_lo, h_hi)

    half = o_ref.shape[1]
    acc = acc_ref[...]
    bias = b_ref[...].astype(jnp.float32)        # (2T, 1) broadcasts over lanes
    gated = (acc[:half, :] + bias[:half, :]) * jax.nn.sigmoid(
        acc[half:, :] + bias[half:, :])
    o_ref[...] = gated.reshape(o_ref.shape).astype(o_ref.dtype)


def _vmem_capacity_bytes():
    """Physical VMEM per core; conservative (v7x-sized) default if unknown."""
    try:
        info = pltpu.get_tpu_info()
        cap = getattr(info, "vmem_capacity_bytes", None)
        if cap:
            return int(cap)
    except Exception:
        pass
    return 64 * 1024 * 1024


def _plan_blocks(C, S, S_out, KH, x_item, comp_item, cout_block):
    """Pick the out-channel block size T (halo-free VMEM knob) and an explicit
    vmem limit, sized per TPU generation (~45% of physical for the blocks)."""
    cap = _vmem_capacity_bytes()
    budget = int(cap * 0.45)            # ~28 MiB on v7x, ~57 MiB on v5e/v6e

    def need(t):
        x_blk = C * S * x_item                      # double-buffered input
        o_blk = t * S_out * x_item                  # double-buffered output
        w_blk = KH * 2 * t * C * comp_item          # double-buffered weights
        b_blk = 2 * t * 4
        acc = 2 * t * S_out * 4                     # f32 accumulator scratch
        return 2 * (x_blk + o_blk + w_blk + b_blk) + acc

    if cout_block is not None:
        t = int(cout_block)
        if not (t == C or (C % t == 0 and t % 8 == 0)):
            raise ValueError(
                "cout_block must equal C, or divide C and be a multiple of 8")
    else:
        cands = [C] + sorted((d for d in range(8, C, 8) if C % d == 0),
                             reverse=True)
        t = next((c for c in cands if need(c) <= budget), cands[-1])

    if need(t) > int(cap * 0.9):
        # TODO(synk): halo-based H tiling (manual DMA) needed for this size.
        raise ValueError(
            f"GatedConv blocks need {need(t)} bytes of VMEM but only {cap} "
            "are available; spatial (H) tiling is not implemented.")
    vmem_limit = min(cap, max(need(t) + (4 << 20), 32 << 20))
    return t, vmem_limit


def gated_conv_forward(x_nchw, V, g, b, *, width=3, nopad=False,
                       compute_dtype=jnp.bfloat16, cout_block=None):
    """GatedConv forward (inference). x_nchw: (N, C, H, W) -> (N, C, H_out, W)."""
    N, C, H, W = x_nchw.shape
    KH = width
    out_channels = 2 * C
    pad = (width // 2) * (1 - int(nopad))
    H_out = H + 2 * pad - (KH - 1)
    S, S_out = H * W, H_out * W

    # ---- weight normalization (tiny, plain JAX, f32) ----
    v_norm = jnp.sqrt(jnp.sum(V.reshape(out_channels, -1) ** 2, axis=1))
    w_all = ((g / v_norm)[:, None, None, None] * V)[:, :, :, 0]     # (2C, C, KH)

    x_item = jnp.dtype(x_nchw.dtype).itemsize
    comp_item = jnp.dtype(compute_dtype).itemsize
    T, vmem_limit = _plan_blocks(C, S, S_out, KH, x_item, comp_item, cout_block)
    nb = C // T

    # Fused weight, rows permuted so out-channel block j is [out_j ; gate_j]:
    # one jnp.dot per tap, and the GLU split is a static slice at T.
    wo, wg = w_all[:C], w_all[C:]
    w_perm = jnp.concatenate(
        [wo.reshape(nb, T, C, KH), wg.reshape(nb, T, C, KH)],
        axis=1).reshape(out_channels, C, KH)
    w_kern = jnp.transpose(w_perm, (2, 0, 1)).astype(compute_dtype)  # (KH,2C,C)
    b_perm = jnp.concatenate(
        [b[:C].reshape(nb, T), b[C:].reshape(nb, T)],
        axis=1).reshape(out_channels, 1).astype(jnp.float32)

    # Native-layout input: free reshape, NO transpose / cast HBM pass.
    x_flat = x_nchw.reshape(N, C, S)

    # ---- static tap plan (H zero-padding realized by trimming ranges) ----
    plan = []
    for t in range(KH):
        h_lo = max(0, pad - t)
        h_hi = min(H_out, H + pad - t)
        if h_hi > h_lo:
            plan.append((t, h_lo, h_hi))
    if plan:
        init_idx = max(range(len(plan)), key=lambda i: plan[i][2] - plan[i][1])
        init_tap = plan[init_idx]
        rest_taps = tuple(p for i, p in enumerate(plan) if i != init_idx)
        zero_cols = []
        if init_tap[1] > 0:
            zero_cols.append((0, init_tap[1] * W))
        if init_tap[2] < H_out:
            zero_cols.append((init_tap[2] * W, S_out))
    else:  # degenerate (H smaller than the kernel with nopad)
        init_tap, rest_taps, zero_cols = None, (), [(0, S_out)]

    flops = 2 * N * out_channels * C * W * sum(r[2] - r[1] for r in plan)
    cost = pl.CostEstimate(
        flops=int(flops),
        transcendentals=int(N * C * S_out),
        bytes_accessed=int(N * C * S * x_item + N * C * S_out * x_item
                           + KH * out_channels * C * comp_item
                           + out_channels * 4),
    )

    kernel = functools.partial(
        _gated_conv_kernel, init_tap=init_tap, rest_taps=rest_taps,
        zero_cols=tuple(zero_cols), w_cols=W, pad=pad,
        compute_dtype=compute_dtype)

    out_flat = pl.pallas_call(
        kernel,
        out_shape=jax.ShapeDtypeStruct((N, C, S_out), x_nchw.dtype),
        grid_spec=pltpu.PrefetchScalarGridSpec(
            num_scalar_prefetch=0,
            grid=(N, nb),               # inner axis = out-channel blocks
            in_specs=[
                pl.BlockSpec((1, C, S), lambda n, j: (n, 0, 0)),
                pl.BlockSpec((KH, 2 * T, C), lambda n, j: (0, j, 0)),
                pl.BlockSpec((2 * T, 1), lambda n, j: (j, 0)),
            ],
            out_specs=pl.BlockSpec((1, T, S_out), lambda n, j: (n, j, 0)),
            scratch_shapes=[pltpu.VMEM((2 * T, S_out), jnp.float32)],
        ),
        compiler_params=pltpu.CompilerParams(
            dimension_semantics=("parallel", "parallel"),
            vmem_limit_bytes=int(vmem_limit)),
        cost_estimate=cost,
    )(x_flat, w_kern, b_perm)

    return out_flat.reshape(N, C, H_out, W)


def _reference(x_nchw, V, g, b, *, width=3, nopad=False):
    """Pure-JAX f32 reference of the same forward, for a correctness check."""
    C = x_nchw.shape[1]
    pad = (width // 2) * (1 - int(nopad))
    v_norm = jnp.sqrt(jnp.sum(V.reshape(2 * C, -1) ** 2, axis=1))
    w = (g / v_norm)[:, None, None, None] * V                 # (2C, C, KH, 1)
    y = jax.lax.conv_general_dilated(
        x_nchw, w, window_strides=(1, 1),
        padding=((pad, pad), (0, 0)),
        dimension_numbers=("NCHW", "OIHW", "NCHW"))
    y = y + b[None, :, None, None]
    out, gate = jnp.split(y, 2, axis=1)
    return out * jax.nn.sigmoid(gate)


def _make_params(key, C, width, dropout):
    kV, kg, kb = jax.random.split(key, 3)
    fan_in = C * width
    fan_out = 2 * C * width
    gain = (4.0 * (1.0 - dropout)) ** 0.5
    limit = gain * (6.0 / (fan_in + fan_out)) ** 0.5
    V = jax.random.uniform(kV, (2 * C, C, width, 1), jnp.float32,
                           minval=-limit, maxval=limit)
    g = jax.random.uniform(kg, (2 * C,), jnp.float32, minval=0.5, maxval=1.5)
    b = jax.random.uniform(kb, (2 * C,), jnp.float32, minval=-0.1, maxval=0.1)
    return V, g, b


if __name__ == "__main__":
    width, dropout = 3, 0.2
    key = jax.random.PRNGKey(0)
    k1, k2, k3 = jax.random.split(key, 3)

    # --- case 1: padded path, C=4 (single out-channel block) ---
    N, C, H, W = 2, 4, 16, 16
    x = jax.random.normal(k1, (N, C, H, W), jnp.float32)
    V, g, b = _make_params(k2, C, width, dropout)

    fwd = jax.jit(functools.partial(gated_conv_forward, width=width, nopad=False))
    out = fwd(x, V, g, b)
    jax.block_until_ready(out)
    ref = _reference(x, V, g, b, width=width, nopad=False)
    assert out.shape == (N, C, H, W), out.shape
    # bf16 matmul inputs with f32 accumulation -> loosened tolerance.
    assert jnp.allclose(out, ref, atol=5e-2, rtol=5e-2), float(
        jnp.max(jnp.abs(out - ref)))

    # --- case 2: nopad path (exercises the trimmed-tap plan) ---
    fwd_np = jax.jit(functools.partial(gated_conv_forward, width=width, nopad=True))
    out_np = fwd_np(x, V, g, b)
    jax.block_until_ready(out_np)
    ref_np = _reference(x, V, g, b, width=width, nopad=True)
    assert out_np.shape == (N, C, H - (width - 1), W), out_np.shape
    assert jnp.allclose(out_np, ref_np, atol=5e-2, rtol=5e-2), float(
        jnp.max(jnp.abs(out_np - ref_np)))

    # --- case 3: multiple out-channel blocks (C=16, cout_block=8) ---
    C2 = 16
    x2 = jax.random.normal(k3, (N, C2, H, W), jnp.float32)
    V2, g2, b2 = _make_params(jax.random.PRNGKey(7), C2, width, dropout)
    fwd_blk = jax.jit(functools.partial(gated_conv_forward, width=width,
                                        nopad=False, cout_block=8))
    out_blk = fwd_blk(x2, V2, g2, b2)
    jax.block_until_ready(out_blk)
    ref_blk = _reference(x2, V2, g2, b2, width=width, nopad=False)
    assert out_blk.shape == (N, C2, H, W), out_blk.shape
    assert jnp.allclose(out_blk, ref_blk, atol=5e-2, rtol=5e-2), float(
        jnp.max(jnp.abs(out_blk - ref_blk)))

    print("KERNEL_OK")
</pallas_src>

<mosaic_0001>
module attributes {stable_mosaic.version = 11 : i64} {
  func.func @_gated_conv_kernel(%arg0: i32, %arg1: i32, %arg2: memref<1x4x256xf32, #tpu.memory_space<vmem>>, %arg3: memref<3x8x4xbf16, #tpu.memory_space<vmem>>, %arg4: memref<8x1xf32, #tpu.memory_space<vmem>>, %arg5: memref<1x4x256xf32, #tpu.memory_space<vmem>>, %arg6: memref<8x256xf32, #tpu.memory_space<vmem>>) attributes {dimension_semantics = [#tpu.dimension_semantics<parallel>, #tpu.dimension_semantics<parallel>], iteration_bounds = array<i64: 2, 1>, scalar_prefetch = 0 : i64, scratch_operands = 1 : i64, tpu.core_type = #tpu.core_type<tc>, window_params = [{transform_indices = @transform_0, window_bounds = array<i64: 1, 4, 256>}, {transform_indices = @transform_1, window_bounds = array<i64: 3, 8, 4>}, {transform_indices = @transform_2, window_bounds = array<i64: 8, 1>}, {transform_indices = @transform_3, window_bounds = array<i64: 1, 4, 256>}]} {
    %c0 = arith.constant 0 : index
    %c0_0 = arith.constant 0 : index
    %c0_1 = arith.constant 0 : index
    %0 = vector.load %arg2[%c0, %c0_0, %c0_1] : memref<1x4x256xf32, #tpu.memory_space<vmem>>, vector<1x4x256xf32>
    %1 = vector.shape_cast %0 : vector<1x4x256xf32> to vector<4x256xf32>
    %2 = arith.truncf %1 : vector<4x256xf32> to vector<4x256xbf16>
    %c1 = arith.constant 1 : index
    %c0_2 = arith.constant 0 : index
    %c0_3 = arith.constant 0 : index
    %3 = vector.load %arg3[%c1, %c0_2, %c0_3] : memref<3x8x4xbf16, #tpu.memory_space<vmem>>, vector<1x8x4xbf16>
    %4 = vector.shape_cast %3 : vector<1x8x4xbf16> to vector<8x4xbf16>
    %cst = arith.constant dense<0.000000e+00> : vector<8x256xf32>
    %5 = tpu.matmul %4, %2, %cst {dimension_numbers = #tpu.dot_dimension_numbers<[1], [0], [0], [1], [0, 0, 1, 1], [], []>} : vector<8x4xbf16>, vector<4x256xbf16>, vector<8x256xf32> -> vector<8x256xf32>
    %c0_4 = arith.constant 0 : index
    %c0_5 = arith.constant 0 : index
    %6 = vector.load %arg6[%c0_4, %c0_5] : memref<8x256xf32, #tpu.memory_space<vmem>>, vector<8x256xf32>
    tpu.vector_store %arg6[%c0_4, %c0_5], %5 {strides = array<i32>} : memref<8x256xf32, #tpu.memory_space<vmem>>, vector<8x256xf32>,
    %c0_6 = arith.constant 0 : index
    %c16 = arith.constant 16 : index
    %7 = vector.load %arg6[%c0_6, %c16] : memref<8x256xf32, #tpu.memory_space<vmem>>, vector<8x240xf32>
    %c0_7 = arith.constant 0 : index
    %c0_8 = arith.constant 0 : index
    %c0_9 = arith.constant 0 : index
    %8 = vector.load %arg2[%c0_7, %c0_8, %c0_9] : memref<1x4x256xf32, #tpu.memory_space<vmem>>, vector<1x4x240xf32>
    %9 = vector.shape_cast %8 : vector<1x4x240xf32> to vector<4x240xf32>
    %10 = arith.truncf %9 : vector<4x240xf32> to vector<4x240xbf16>
    %c0_10 = arith.constant 0 : index
    %c0_11 = arith.constant 0 : index
    %c0_12 = arith.constant 0 : index
    %11 = vector.load %arg3[%c0_10, %c0_11, %c0_12] : memref<3x8x4xbf16, #tpu.memory_space<vmem>>, vector<1x8x4xbf16>
    %12 = vector.shape_cast %11 : vector<1x8x4xbf16> to vector<8x4xbf16>
    %cst_13 = arith.constant dense<0.000000e+00> : vector<8x240xf32>
    %13 = tpu.matmul %12, %10, %cst_13 {dimension_numbers = #tpu.dot_dimension_numbers<[1], [0], [0], [1], [0, 0, 1, 1], [], []>} : vector<8x4xbf16>, vector<4x240xbf16>, vector<8x240xf32> -> vector<8x240xf32>
    %14 = arith.addf %7, %13 : vector<8x240xf32>
    %c0_14 = arith.constant 0 : index
    %c16_15 = arith.constant 16 : index
    %15 = vector.load %arg6[%c0_14, %c16_15] : memref<8x256xf32, #tpu.memory_space<vmem>>, vector<8x240xf32>
    tpu.vector_store %arg6[%c0_14, %c16_15], %14 {strides = array<i32>} : memref<8x256xf32, #tpu.memory_space<vmem>>, vector<8x240xf32>,
    %c0_16 = arith.constant 0 : index
    %c0_17 = arith.constant 0 : index
    %16 = vector.load %arg6[%c0_16, %c0_17] : memref<8x256xf32, #tpu.memory_space<vmem>>, vector<8x240xf32>
    %c0_18 = arith.constant 0 : index
    %c0_19 = arith.constant 0 : index
    %c16_20 = arith.constant 16 : index
    %17 = vector.load %arg2[%c0_18, %c0_19, %c16_20] : memref<1x4x256xf32, #tpu.memory_space<vmem>>, vector<1x4x240xf32>
    %18 = vector.shape_cast %17 : vector<1x4x240xf32> to vector<4x240xf32>
    %19 = arith.truncf %18 : vector<4x240xf32> to vector<4x240xbf16>
    %c2 = arith.constant 2 : index
    %c0_21 = arith.constant 0 : index
    %c0_22 = arith.constant 0 : index
    %20 = vector.load %arg3[%c2, %c0_21, %c0_22] : memref<3x8x4xbf16, #tpu.memory_space<vmem>>, vector<1x8x4xbf16>
    %21 = vector.shape_cast %20 : vector<1x8x4xbf16> to vector<8x4xbf16>
    %cst_23 = arith.constant dense<0.000000e+00> : vector<8x240xf32>
    %22 = tpu.matmul %21, %19, %cst_23 {dimension_numbers = #tpu.dot_dimension_numbers<[1], [0], [0], [1], [0, 0, 1, 1], [], []>} : vector<8x4xbf16>, vector<4x240xbf16>, vector<8x240xf32> -> vector<8x240xf32>
    %23 = arith.addf %16, %22 : vector<8x240xf32>
    %c0_24 = arith.constant 0 : index
    %c0_25 = arith.constant 0 : index
    %24 = vector.load %arg6[%c0_24, %c0_25] : memref<8x256xf32, #tpu.memory_space<vmem>>, vector<8x240xf32>
    tpu.vector_store %arg6[%c0_24, %c0_25], %23 {strides = array<i32>} : memref<8x256xf32, #tpu.memory_space<vmem>>, vector<8x240xf32>,
    %c0_26 = arith.constant 0 : index
    %c0_27 = arith.constant 0 : index
    %25 = vector.load %arg6[%c0_26, %c0_27] : memref<8x256xf32, #tpu.memory_space<vmem>>, vector<8x256xf32>
    %c0_28 = arith.constant 0 : index
    %c0_29 = arith.constant 0 : index
    %26 = vector.load %arg4[%c0_28, %c0_29] : memref<8x1xf32, #tpu.memory_space<vmem>>, vector<8x1xf32>
    %27 = vector.extract_strided_slice %25 {offsets = [0, 0], sizes = [4, 256], strides = [1, 1]} : vector<8x256xf32> to vector<4x256xf32>
    %28 = vector.extract_strided_slice %26 {offsets = [0, 0], sizes = [4, 1], strides = [1, 1]} : vector<8x1xf32> to vector<4x1xf32>
    %29 = vector.broadcast %28 : vector<4x1xf32> to vector<4x256xf32>
    %30 = arith.addf %27, %29 : vector<4x256xf32>
    %31 = vector.extract_strided_slice %25 {offsets = [4, 0], sizes = [4, 256], strides = [1, 1]} : vector<8x256xf32> to vector<4x256xf32>
    %32 = vector.extract_strided_slice %26 {offsets = [4, 0], sizes = [4, 1], strides = [1, 1]} : vector<8x1xf32> to vector<4x1xf32>
    %33 = vector.broadcast %32 : vector<4x1xf32> to vector<4x256xf32>
    %34 = arith.addf %31, %33 : vector<4x256xf32>
    %35 = arith.negf %34 : vector<4x256xf32>
    %36 = math.exp %35 : vector<4x256xf32>
    %cst_30 = arith.constant 1.000000e+00 : f32
    %37 = vector.broadcast %cst_30 : f32 to vector<4x256xf32>
    %38 = arith.addf %37, %36 : vector<4x256xf32>
    %39 = arith.divf %37, %38 : vector<4x256xf32>
    %40 = arith.mulf %30, %39 : vector<4x256xf32>
    %41 = vector.shape_cast %40 : vector<4x256xf32> to vector<1x4x256xf32>
    %c0_31 = arith.constant 0 : index
    %c0_32 = arith.constant 0 : index
    %c0_33 = arith.constant 0 : index
    %42 = vector.load %arg5[%c0_31, %c0_32, %c0_33] : memref<1x4x256xf32, #tpu.memory_space<vmem>>, vector<1x4x256xf32>
    tpu.vector_store %arg5[%c0_31, %c0_32, %c0_33], %41 {strides = array<i32>} : memref<1x4x256xf32, #tpu.memory_space<vmem>>, vector<1x4x256xf32>,
    return
  }
  func.func @transform_0(%arg0: i32, %arg1: i32) -> (i32, i32, i32) {
    %c0_i32 = arith.constant 0 : i32
    %c0_i32_0 = arith.constant 0 : i32
    %c0_i32_1 = arith.constant 0 : i32
    return %arg0, %c0_i32, %c0_i32_0 : i32, i32, i32
  }
  func.func @transform_1(%arg0: i32, %arg1: i32) -> (i32, i32, i32) {
    %c0_i32 = arith.constant 0 : i32
    %c0_i32_0 = arith.constant 0 : i32
    %c0_i32_1 = arith.constant 0 : i32
    return %c0_i32, %arg1, %c0_i32_0 : i32, i32, i32
  }
  func.func @transform_2(%arg0: i32, %arg1: i32) -> (i32, i32) {
    %c0_i32 = arith.constant 0 : i32
    %c0_i32_0 = arith.constant 0 : i32
    return %arg1, %c0_i32 : i32, i32
  }
  func.func @transform_3(%arg0: i32, %arg1: i32) -> (i32, i32, i32) {
    %c0_i32 = arith.constant 0 : i32
    %c0_i32_0 = arith.constant 0 : i32
    return %arg0, %arg1, %c0_i32 : i32, i32, i32
  }
}

</mosaic_0001>

<llo_original>
// kernel: gated_conv_forward.1
$region0: #{gated_conv_forward.1}
  #allocation0 [shape = 'u32[]', space=smem, size = 0x4, offset = 0x4, fixed_abs, tag = 'smem constant byte address 0x4 - core index']
  #allocation1 [shape = 'u32[72,128]{1,0:T(1,128)}', space=vmem, size = 0x9000, scoped, tag = 'internal scratch']
  #allocation2 [shape = 'f32[8,256]{1,0:T(8,128)}', space=vmem, size = 0x2000, scoped, tag = 'scratch operand']
  %s0 = inlined_call_operand.vmem [shape: f32[2,4,256], index: 0, kind: input, shape index: {}]
  %s1 = inlined_call_operand.vmem [shape: bf16[3,8,4], index: 1, kind: input, shape index: {}]
  %s2 = inlined_call_operand.vmem [shape: f32[8,1], index: 2, kind: input, shape index: {}]
  %s3 = inlined_call_operand.vmem [shape: f32[2,4,256], index: 3, kind: output, shape index: {}]
  %s4 = sld [smem:[#allocation0]]
  $region45: #{gated_conv_forward.1} parent=0
    _
  %s6 = ssub.s32 1, %s4
  %s7 = scalar_select 0, %s6, %s4
  loop: start=0, step=1, limit=4
  $region2: #{gated_conv_forward.1} parent=0 // loop_pre_header
    _
  $region3: #{gated_conv_forward.1} parent=0 // loop_header
    %s9 = sphi 0, %s13
    %p10 = scmp.ge.s32.totalorder %s9, 4
    %s16 = sphi 0, %s28
    %s17 = sphi 0, %s24
    %s18 = sphi 0, %s16
    %s19 = sphi 0, %s17
    %s20 = sphi 0, %s18
    %s21 = sphi 0, %s19
    %s31 = sphi 0, %s33
    %s34 = sphi 0, %s31
    %s35 = sphi 0, %s34
    %s51 = sphi 0, %s35
    %s57 = sphi 0, %s59
    %s60 = sphi 0, %s57
    %s61 = sphi 0, %s60
    %s77 = sphi 0, %s61
    %s83 = sphi 0, %s85
    %s86 = sphi 0, %s83
    %s87 = sphi 0, %s86
    %s103 = sphi 0, %s87
    %s111 = sphi 0, %s113
    %s114 = sphi 0, %s111
    %s115 = sphi 0, %s114
    %s131 = sphi 0, %s115
  $region4: #{gated_conv_forward.1} parent=0 // loop_header_branch
    %12 = sbr.rel (%p10) target = $region8
  $region5: #{gated_conv_forward.1} parent=0 // loop_body
    %s14 = ssub.s32 %s9, 1
    %s15 = ssub.s32 %s9, 2
    %s22 = sadd.s32 1, %s17
    %p23 = scmp.ge.s32.totalorder %s22, 1
    %s24 = scalar_select %p23, 0, %s22
    %s25 = sadd.s32 1, %s16
    %s26 = scalar_select %p23, %s25, %s16
    %p27 = scmp.ge.s32.totalorder %s26, 2
    %s28 = scalar_select %p27, 0, %s26
    %s29 = ssub.s32 %s16, %s28
    %p30 = scmp.eq.s32.totalorder %s29, 0
    %s32 = sadd.s32 %s31, 1
    %s33 = scalar_select %p30, %s31, %s32
    %p36 = pneg %p30
    %p37 = scmp.eq.s32.totalorder %s9, 1
    %p38 = por %p36, %p37
    %p39 = scmp.ne.s32.totalorder %s31, %s34
    %p40 = scmp.eq.s32.totalorder %s9, 0
    %p41 = por %p39, %p40
    %p42 = scmp.ne.s32.totalorder %s31, %s34
    %p43 = scmp.eq.s32.totalorder %s14, 1
    %p44 = por %p42, %p43
    %p45 = scmp.ne.s32.totalorder %s34, %s35
    %p46 = scmp.eq.s32.totalorder %s14, 0
    %p47 = por %p45, %p46
    %p48 = scmp.ne.s32.totalorder %s34, %s35
    %p49 = scmp.eq.s32.totalorder %s15, 1
    %p50 = por %p48, %p49
    %p52 = scmp.ne.s32.totalorder %s35, %s51
    %p53 = scmp.eq.s32.totalorder %s15, 0
    %p54 = por %p52, %p53
    %s55 = ssub.s32 %s17, %s24
    %p56 = scmp.eq.s32.totalorder %s55, 0
    %s58 = sadd.s32 %s57, 1
    %s59 = scalar_select %p56, %s57, %s58
    %p62 = pneg %p56
    %p63 = scmp.eq.s32.totalorder %s9, 1
    %p64 = por %p62, %p63
    %p65 = scmp.ne.s32.totalorder %s57, %s60
    %p66 = scmp.eq.s32.totalorder %s9, 0
    %p67 = por %p65, %p66
    %p68 = scmp.ne.s32.totalorder %s57, %s60
    %p69 = scmp.eq.s32.totalorder %s14, 1
    %p70 = por %p68, %p69
    %p71 = scmp.ne.s32.totalorder %s60, %s61
    %p72 = scmp.eq.s32.totalorder %s14, 0
    %p73 = por %p71, %p72
    %p74 = scmp.ne.s32.totalorder %s60, %s61
    %p75 = scmp.eq.s32.totalorder %s15, 1
    %p76 = por %p74, %p75
    %p78 = scmp.ne.s32.totalorder %s61, %s77
    %p79 = scmp.eq.s32.totalorder %s15, 0
    %p80 = por %p78, %p79
    %s81 = ssub.s32 %s17, %s24
    %p82 = scmp.eq.s32.totalorder %s81, 0
    %s84 = sadd.s32 %s83, 1
    %s85 = scalar_select %p82, %s83, %s84
    %p88 = pneg %p82
    %p89 = scmp.eq.s32.totalorder %s9, 1
    %p90 = por %p88, %p89
    %p91 = scmp.ne.s32.totalorder %s83, %s86
    %p92 = scmp.eq.s32.totalorder %s9, 0
    %p93 = por %p91, %p92
    %p94 = scmp.ne.s32.totalorder %s83, %s86
    %p95 = scmp.eq.s32.totalorder %s14, 1
    %p96 = por %p94, %p95
    %p97 = scmp.ne.s32.totalorder %s86, %s87
    %p98 = scmp.eq.s32.totalorder %s14, 0
    %p99 = por %p97, %p98
    %p100 = scmp.ne.s32.totalorder %s86, %s87
    %p101 = scmp.eq.s32.totalorder %s15, 1
    %p102 = por %p100, %p101
    %p104 = scmp.ne.s32.totalorder %s87, %s103
    %p105 = scmp.eq.s32.totalorder %s15, 0
    %p106 = por %p104, %p105
    %s107 = ssub.s32 %s16, %s28
    %s108 = ssub.s32 %s17, %s24
    %s109 = sor.u32 %s107, %s108
    %p110 = scmp.eq.s32.totalorder %s109, 0
    %s112 = sadd.s32 %s111, 1
    %s113 = scalar_select %p110, %s111, %s112
    %p116 = pneg %p110
    %p117 = scmp.eq.s32.totalorder %s9, 1
    %p118 = por %p116, %p117
    %p119 = scmp.ne.s32.totalorder %s111, %s114
    %p120 = scmp.eq.s32.totalorder %s9, 0
    %p121 = por %p119, %p120
    %p122 = scmp.ne.s32.totalorder %s111, %s114
    %p123 = scmp.eq.s32.totalorder %s14, 1
    %p124 = por %p122, %p123
    %p125 = scmp.ne.s32.totalorder %s114, %s115
    %p126 = scmp.eq.s32.totalorder %s14, 0
    %p127 = por %p125, %p126
    %p128 = scmp.ne.s32.totalorder %s114, %s115
    %p129 = scmp.eq.s32.totalorder %s15, 1
    %p130 = por %p128, %p129
    %p132 = scmp.ne.s32.totalorder %s115, %s131
    %p133 = scmp.eq.s32.totalorder %s15, 0
    %p134 = por %p132, %p133
    %p135 = scmp.le.s32.totalorder 1, %s9
    %p136 = scmp.lt.s32.totalorder %s9, 3
    %p137 = pnand %p135, %p136
    %p138 = pneg %p137
    // Predicated region
    $region9: #{gated_conv_forward.1} parent=5 // pred_check
      _
    $region10: #{gated_conv_forward.1} parent=5 // pred_check_branch
      %140 = sbr.rel (%p137) target = $region12
    $region11: #{gated_conv_forward.1} parent=5 // pred_region
      %s141 = ssub.s32 %s9, 1
      // Predicated region
      $region13: #{gated_conv_forward.1} parent=11 // pred_check
        %p142 = pneg %p73
      $region14: #{gated_conv_forward.1} parent=11 // pred_check_branch
        %144 = sbr.rel (%p142) target = $region16
      $region15: #{gated_conv_forward.1} parent=11 // pred_region
        %p145 = scmp.lt.s32.totalorder %s19, 0
        %s146 = scalar_select %p145, %s19, 0
        %s147 = smul.addr %s146, 4
        %s148 = scalar_lea.vmem %s1, %s147
      $region16: #{gated_conv_forward.1} parent=11 // pred_fallthru
        _
      // Predicated region
      $region17: #{gated_conv_forward.1} parent=11 // pred_check
        %p149 = pneg %p99
      $region18: #{gated_conv_forward.1} parent=11 // pred_check_branch
        %151 = sbr.rel (%p149) target = $region20
      $region19: #{gated_conv_forward.1} parent=11 // pred_region
        %p152 = scmp.lt.s32.totalorder %s19, 0
        %s153 = scalar_select %p152, %s19, 0
        %s154 = smul.addr %s153, 8
        %s155 = scalar_lea.vmem %s2, %s154
      $region20: #{gated_conv_forward.1} parent=11 // pred_fallthru
        _
    $region12: #{gated_conv_forward.1} parent=5 // pred_fallthru
      _
    %p156 = scmp.lt.s32.totalorder %s9, 2
    // Predicated region
    $region21: #{gated_conv_forward.1} parent=5 // pred_check
      %p157 = pneg %p156
    $region22: #{gated_conv_forward.1} parent=5 // pred_check_branch
      %159 = sbr.rel (%p157) target = $region24
    $region23: #{gated_conv_forward.1} parent=5 // pred_region
      // Predicated region
      $region25: #{gated_conv_forward.1} parent=23 // pred_check
        %p160 = pneg %p41
      $region26: #{gated_conv_forward.1} parent=23 // pred_check_branch
        %162 = sbr.rel (%p160) target = $region28
      $region27: #{gated_conv_forward.1} parent=23 // pred_region
        %p163 = scmp.lt.s32.totalorder %s16, 1
        %s164 = scalar_select %p163, %s16, 1
        %s165 = smul.addr %s164, 2
        %s166 = smul.addr %s165, 4
        %s167 = scalar_lea.vmem %s0, %s166
      $region28: #{gated_conv_forward.1} parent=23 // pred_fallthru
        _
    $region24: #{gated_conv_forward.1} parent=5 // pred_fallthru
      _
    %p168 = scmp.le.s32.totalorder 1, %s9
    %p169 = scmp.lt.s32.totalorder %s9, 3
    %p170 = pnand %p168, %p169
    %p171 = pneg %p170
    // Predicated region
    $region29: #{gated_conv_forward.1} parent=5 // pred_check
      _
    $region30: #{gated_conv_forward.1} parent=5 // pred_check_branch
      %173 = sbr.rel (%p170) target = $region32
    $region31: #{gated_conv_forward.1} parent=5 // pred_region
      %s174 = ssub.s32 %s9, 1
      %p175 = scmp.lt.s32.totalorder %s18, 1
      %s176 = scalar_select %p175, %s18, 1
      %s177 = smul.addr %s176, 2
      %s178 = smul.addr %s177, 4
      %s179 = scalar_lea.vmem %s0, %s178
      %p180 = pneg %p47
      %p181 = pneg %p44
      %p182 = scmp.lt.s32.totalorder %s19, 0
      %s183 = scalar_select %p182, %s19, 0
      %s184 = smul.addr %s183, 4
      %s185 = scalar_lea.vmem %s1, %s184
      %p186 = pneg %p73
      %p187 = pneg %p70
      %p188 = scmp.lt.s32.totalorder %s19, 0
      %s189 = scalar_select %p188, %s19, 0
      %s190 = smul.addr %s189, 8
      %s191 = scalar_lea.vmem %s2, %s190
      %p192 = pneg %p99
      %p193 = pneg %p96
      %p194 = pneg %p127
      %p195 = pneg %p124
      %p196 = scmp.lt.s32.totalorder %s18, 1
      %s197 = scalar_select %p196, %s18, 1
      %p198 = scmp.lt.s32.totalorder %s19, 0
      %s199 = scalar_select %p198, %s19, 0
      %s200 = smul.addr %s199, 2
      %s201 = smul.addr %s197, 2
      %s202 = sadd.s32 %s200, %s201
      %s203 = smul.addr %s202, 4
      %s204 = scalar_lea.vmem %s3, %s203
      %p205 = scmp.lt.s32.totalorder %s18, 1
      %s206 = scalar_select %p205, %s18, 1
      %s207 = smul.addr %s206, 2
      %s208 = smul.addr %s207, 4
      %s209 = scalar_lea.vmem %s0, %s208
      %p210 = scmp.lt.s32.totalorder %s19, 0
      %s211 = scalar_select %p210, %s19, 0
      %s212 = smul.addr %s211, 4
      %s213 = scalar_lea.vmem %s1, %s212
      %p214 = scmp.lt.s32.totalorder %s19, 0
      %s215 = scalar_select %p214, %s19, 0
      %s216 = smul.addr %s215, 8
      %s217 = scalar_lea.vmem %s2, %s216
      %p218 = scmp.lt.s32.totalorder %s18, 1
      %s219 = scalar_select %p218, %s18, 1
      %p220 = scmp.lt.s32.totalorder %s19, 0
      %s221 = scalar_select %p220, %s19, 0
      %s222 = smul.addr %s221, 2
      %s223 = smul.addr %s219, 2
      %s224 = sadd.s32 %s222, %s223
      %s225 = smul.addr %s224, 4
      %s226 = scalar_lea.vmem %s3, %s225
      %v228 = vld [vmem:[%s209] sm:$0xff]
      %230 = vst [vmem:[#allocation1] ss:$2 sm:$0xff] %v228
      %v231 = vld.sshfl [vmem:[#allocation1] sm:$0xff pattern:$0x75316420]
      %v232 = vld.sshfl [vmem:[#allocation1 + $0x8] sm:$0xff pattern:$0x75316420]
      %v235 = vpack.c.bf16 %v231, %v231
      %v236 = vpack.c.bf16 %v232, %v232
      %s237 = scalar_lea.vmem %s213, 4
      %v238 = vld [vmem:[%s237] sm:$0xf]
      %vm239 = vcmask 31744
      %v241 = vsel %vm239, %v238, 0
      %vm243 = vcmask 1041408
      %v245 = vsel %vm243, %v235, 0
      %v248 = vsel %vm243, %v236, 0
      %250 = vmatpush.bf16.msra.mxu0 0
      %251 = vmatpush.bf16.msra.mxu0 0
      %252 = vmatpush.bf16.msra.mxu0 0
      %253 = vmatpush.bf16.msra.mxu0 0
      %254 = vmatpush.bf16.msra.mxu0 0
      %255 = vmatpush.bf16.msra.mxu0 0
      %256 = vmatpush.bf16.msra.mxu0 0
      %257 = vmatpush.bf16.msra.mxu0 %v245
      %258 = vmatmul.bf16.gmra.mxu0 %v241
      %v259 = vpop.f32.mrf.mxu0
      %v260 = vadd.f32 0.0, %v259
      %v261 = vpop.f32.mrf.mxu0
      %262 = vdwg.mxu0
      %263 = vmatpush.bf16.msra.mxu0 0
      %264 = vmatpush.bf16.msra.mxu0 0
      %265 = vmatpush.bf16.msra.mxu0 0
      %266 = vmatpush.bf16.msra.mxu0 0
      %267 = vmatpush.bf16.msra.mxu0 0
      %268 = vmatpush.bf16.msra.mxu0 0
      %269 = vmatpush.bf16.msra.mxu0 0
      %270 = vmatpush.bf16.msra.mxu0 %v248
      %271 = vmatmul.bf16.gmra.mxu0 %v241
      %v272 = vpop.f32.mrf.mxu0
      %v273 = vadd.f32 0.0, %v272
      %v274 = vpop.f32.mrf.mxu0
      %275 = vdwg.mxu0
      %276 = vst [vmem:[#allocation2] sm:$0xff] %v260
      %277 = vst [vmem:[#allocation2 + $0x8] sm:$0xff] %v273
      %v278 = vld [vmem:[#allocation2] sm:$0xff]
      %v279 = vld [vmem:[#allocation2 + $0x8] sm:$0xff]
      %v280 = vld [vmem:[%s209] sm:$0xff]
      %282 = vst [vmem:[#allocation1] ss:$2 sm:$0xff] %v280
      %v283 = vld.sshfl [vmem:[#allocation1] sm:$0xff pattern:$0x75316420]
      %v284 = vld.sshfl [vmem:[#allocation1 + $0x8] sm:$0xff pattern:$0x75316420]
      %v287 = vpack.c.bf16 %v283, %v283
      %v288 = vpack.c.bf16 %v284, %v284
      %v289 = vld [vmem:[%s213] sm:$0xf]
      %v291 = vsel %vm239, %v289, 0
      %v294 = vsel %vm243, %v287, 0
      %v297 = vsel %vm243, %v288, 0
      %299 = vmatpush.bf16.msra.mxu0 0
      %300 = vmatpush.bf16.msra.mxu0 0
      %301 = vmatpush.bf16.msra.mxu0 0
      %302 = vmatpush.bf16.msra.mxu0 0
      %303 = vmatpush.bf16.msra.mxu0 0
      %304 = vmatpush.bf16.msra.mxu0 0
      %305 = vmatpush.bf16.msra.mxu0 0
      %306 = vmatpush.bf16.msra.mxu0 %v294
      %307 = vmatmul.bf16.gmra.mxu0 %v291
      %v308 = vpop.f32.mrf.mxu0
      %v309 = vadd.f32 0.0, %v308
      %v310 = vpop.f32.mrf.mxu0
      %311 = vdwg.mxu0
      %312 = vmatpush.bf16.msra.mxu0 0
      %313 = vmatpush.bf16.msra.mxu0 0
      %314 = vmatpush.bf16.msra.mxu0 0
      %315 = vmatpush.bf16.msra.mxu0 0
      %316 = vmatpush.bf16.msra.mxu0 0
      %317 = vmatpush.bf16.msra.mxu0 0
      %318 = vmatpush.bf16.msra.mxu0 0
      %319 = vmatpush.bf16.msra.mxu0 %v297
      %320 = vmatmul.bf16.gmra.mxu0 %v291
      %v321 = vpop.f32.mrf.mxu0
      %v322 = vadd.f32 0.0, %v321
      %v323 = vpop.f32.mrf.mxu0
      %324 = vdwg.mxu0
      %327 = vrot.lane.b32.xlu0 %v309, 16
      %v328 = vpop.permute.xlu0 %327
      %329 = vrot.lane.b32.xlu0 %v322, 16
      %v330 = vpop.permute.xlu0 %329
      %vm331 = vcmask 130048
      %v332 = vsel %vm331, %v328, %v330
      %v335 = vadd.f32 %v278, %v328
      %v336 = vadd.f32 %v279, %v332
      %vm337 = vcmask 1047680
      %338 = vst.msk [vmem:[#allocation2] sm:$0xff] %vm337, %v335
      %339 = vst [vmem:[#allocation2 + $0x8] sm:$0xff] %v336
      %v340 = vld [vmem:[#allocation2] sm:$0xff]
      %v341 = vld [vmem:[#allocation2 + $0x8] sm:$0xff]
      %v342 = vld [vmem:[%s209] sm:$0xff]
      %344 = vst [vmem:[#allocation1] ss:$2 sm:$0xff] %v342
      %v345 = vld.sshfl [vmem:[#allocation1] sm:$0xff pattern:$0x75316420]
      %v346 = vld.sshfl [vmem:[#allocation1 + $0x8] sm:$0xff pattern:$0x75316420]
      %v349 = vpack.c.bf16 %v345, %v345
      %v350 = vpack.c.bf16 %v346, %v346
      %s351 = scalar_lea.vmem %s213, 8
      %v352 = vld [vmem:[%s351] sm:$0xf]
      %355 = vrot.lane.b32.xlu0 %v349, 112
      %v356 = vpop.permute.xlu0 %355
      %357 = vrot.lane.b32.xlu0 %v350, 112
      %v358 = vpop.permute.xlu0 %357
      %vm359 = vcmask 916480
      %v360 = vsel %vm359, %v356, %v358
      %v362 = vsel %vm239, %v352, 0
      %v365 = vsel %vm243, %v360, 0
      %v368 = vsel %vm243, %v358, 0
      %370 = vmatpush.bf16.msra.mxu0 0
      %371 = vmatpush.bf16.msra.mxu0 0
      %372 = vmatpush.bf16.msra.mxu0 0
      %373 = vmatpush.bf16.msra.mxu0 0
      %374 = vmatpush.bf16.msra.mxu0 0
      %375 = vmatpush.bf16.msra.mxu0 0
      %376 = vmatpush.bf16.msra.mxu0 0
      %377 = vmatpush.bf16.msra.mxu0 %v365
      %378 = vmatmul.bf16.gmra.mxu0 %v362
      %v379 = vpop.f32.mrf.mxu0
      %v380 = vadd.f32 0.0, %v379
      %v381 = vpop.f32.mrf.mxu0
      %382 = vdwg.mxu0
      %383 = vmatpush.bf16.msra.mxu0 0
      %384 = vmatpush.bf16.msra.mxu0 0
      %385 = vmatpush.bf16.msra.mxu0 0
      %386 = vmatpush.bf16.msra.mxu0 0
      %387 = vmatpush.bf16.msra.mxu0 0
      %388 = vmatpush.bf16.msra.mxu0 0
      %389 = vmatpush.bf16.msra.mxu0 0
      %390 = vmatpush.bf16.msra.mxu0 %v368
      %391 = vmatmul.bf16.gmra.mxu0 %v362
      %v392 = vpop.f32.mrf.mxu0
      %v393 = vadd.f32 0.0, %v392
      %v394 = vpop.f32.mrf.mxu0
      %395 = vdwg.mxu0
      %v396 = vadd.f32 %v340, %v380
      %v397 = vadd.f32 %v341, %v393
      %398 = vst [vmem:[#allocation2] sm:$0xff] %v396
      %vm399 = vcmask 916480
      %400 = vst.msk [vmem:[#allocation2 + $0x8] sm:$0xff] %vm399, %v397
      %v401 = vld [vmem:[#allocation2] sm:$0xff]
      %v402 = vld [vmem:[#allocation2 + $0x8] sm:$0xff]
      %v403 = vld [vmem:[%s217] sm:$0xff]
      %405 = vset.pattern.permute.xlu0 0
      %406 = vperm.xlu0 %405, %v403
      %v407 = vpop.permute.xlu0 %406
      %v409 = vadd.f32 %v401, %v407
      %v410 = vadd.f32 %v402, %v407
      %v411 = vxor.u32 %v409, 2147483648
      %v412 = vxor.u32 %v410, 2147483648
      %v413 = vmul.f32 %v411, 1.442695
      %v414 = vpow.pop %v413
      %v415 = vmul.f32 %v412, 1.442695
      %v416 = vpow.pop %v415
      %v417 = vadd.f32 %v414, 1.0
      %v418 = vadd.f32 %v416, 1.0
      %v419 = vrcp.pop %v417
      %v420 = vmul.f32 %v417, %v419
      %v421 = vsub.f32 1.0, %v420
      %v422 = vmul.f32 %v419, %v421
      %v423 = vadd.f32 %v419, %v422
      %vm424 = vweird.f32 %v417
      %vm425 = vweird.f32 %v419
      %vm426 = vmor %vm424, %vm425
      %v427 = vsel %vm426, %v419, %v423
      %v428 = vand.u32 2147483647, %v417
      %vm429 = vcmp.eq.f32.partialorder %v428, 8.507059e+37
      %v430 = vand.u32 %v417, 2147483648
      %v431 = vor.u32 1.1754944e-38, %v430
      %v432 = vsel %vm429, %v431, %v427
      %v433 = vmul.f32 1.0, %v432
      %v434 = vrcp.pop %v418
      %v435 = vmul.f32 %v418, %v434
      %v436 = vsub.f32 1.0, %v435
      %v437 = vmul.f32 %v434, %v436
      %v438 = vadd.f32 %v434, %v437
      %vm439 = vweird.f32 %v418
      %vm440 = vweird.f32 %v434
      %vm441 = vmor %vm439, %vm440
      %v442 = vsel %vm441, %v434, %v438
      %v443 = vand.u32 2147483647, %v418
      %vm444 = vcmp.eq.f32.partialorder %v443, 8.507059e+37
      %v445 = vand.u32 %v418, 2147483648
      %v446 = vor.u32 1.1754944e-38, %v445
      %v447 = vsel %vm444, %v446, %v442
      %v448 = vmul.f32 1.0, %v447
      %v451 = vrot.slane %v433, 4
      %v452 = vrot.slane %v448, 4
      %v455 = vmul.f32 %v409, %v451
      %v456 = vmul.f32 %v410, %v452
      %v459 = vrot.slane %v456, 4
      %vm460 = vcmask 1043456
      %v461 = vsel %vm460, %v455, %v459
      %463 = vst [vmem:[%s226] sm:$0xff] %v461
      %p464 = scmp.lt.s32.totalorder %s18, 1
      %s465 = scalar_select %p464, %s18, 1
      %p466 = scmp.lt.s32.totalorder %s19, 0
      %s467 = scalar_select %p466, %s19, 0
      %s468 = smul.addr %s467, 2
      %s469 = smul.addr %s465, 2
      %s470 = sadd.s32 %s468, %s469
      %s471 = smul.addr %s470, 4
      %s472 = scalar_lea.vmem %s3, %s471
      // Predicated region
      $region33: #{gated_conv_forward.1} parent=31 // pred_check
        %p473 = pneg %p124
      $region34: #{gated_conv_forward.1} parent=31 // pred_check_branch
        %475 = sbr.rel (%p473) target = $region36
      $region35: #{gated_conv_forward.1} parent=31 // pred_region
        _
      $region36: #{gated_conv_forward.1} parent=31 // pred_fallthru
        _
    $region32: #{gated_conv_forward.1} parent=5 // pred_fallthru
      _
    %p476 = scmp.le.s32.totalorder 2, %s9
    // Predicated region
    $region37: #{gated_conv_forward.1} parent=5 // pred_check
      %p477 = pneg %p476
    $region38: #{gated_conv_forward.1} parent=5 // pred_check_branch
      %479 = sbr.rel (%p477) target = $region40
    $region39: #{gated_conv_forward.1} parent=5 // pred_region
      %s480 = ssub.s32 %s9, 2
      // Predicated region
      $region41: #{gated_conv_forward.1} parent=39 // pred_check
        %p481 = pneg %p130
      $region42: #{gated_conv_forward.1} parent=39 // pred_check_branch
        %483 = sbr.rel (%p481) target = $region44
      $region43: #{gated_conv_forward.1} parent=39 // pred_region
        %p484 = scmp.lt.s32.totalorder %s20, 1
        %s485 = scalar_select %p484, %s20, 1
        %p486 = scmp.lt.s32.totalorder %s21, 0
        %s487 = scalar_select %p486, %s21, 0
        %s488 = smul.addr %s487, 2
        %s489 = smul.addr %s485, 2
        %s490 = sadd.s32 %s488, %s489
        %s491 = smul.addr %s490, 4
        %s492 = scalar_lea.vmem %s3, %s491
      $region44: #{gated_conv_forward.1} parent=39 // pred_fallthru
        _
    $region40: #{gated_conv_forward.1} parent=5 // pred_fallthru
      _
  $region6: #{gated_conv_forward.1} parent=0 // loop_footer
    %s13 = sadd.s32 1, %s9
  $region7: #{gated_conv_forward.1} parent=0 // loop_footer_branch
    %8 = sbr.rel target = $region3
  $region8: #{gated_conv_forward.1} parent=0 // loop_exit
    _

</llo_original>
